<compile_context>
chip_gen: v7x
topology: tpu7x:2x2x1
jax: 0.10.0
libtpu: 0.0.40
codegen_flags: <defaults>
</compile_context>

<pallas_src>
import functools
import math

import jax
import jax.numpy as jnp
from jax.experimental import pallas as pl
from jax.experimental.pallas import tpu as pltpu


def _cdiv(a, b):
    return (a + b - 1) // b


def _round_up(x, m):
    return ((x + m - 1) // m) * m


def _inverse_model_kernel(state_t_ref, next_state_t_ref,
                          w1a_ref, w1b_ref, w2_ref, b1_ref, b2_ref,
                          out_t_ref):
    # Batch-on-lanes: every ref's last dim is the batch tile.
    #   state_t_ref / next_state_t_ref : (L, tb)
    #   w1a_ref / w1b_ref              : (H, L)   W1[:, :L] / W1[:, L:]
    #   w2_ref                         : (A, H)
    #   b1_ref : (H, 1), b2_ref : (A, 1)
    #   out_t_ref : (A, tb)
    # Layer 1: split-K matmuls replace the concat (no lane shuffle).
    h = jnp.dot(w1a_ref[...], state_t_ref[...],
                preferred_element_type=jnp.float32)
    h = h + jnp.dot(w1b_ref[...], next_state_t_ref[...],
                    preferred_element_type=jnp.float32)
    h = h + b1_ref[...]

    # LeakyReLU, negative_slope = 0.01 (mul + max).
    h = jnp.maximum(h, 0.01 * h)

    # Layer 2.
    logits = jnp.dot(w2_ref[...], h, preferred_element_type=jnp.float32)
    logits = logits + b2_ref[...]

    # Numerically stable softmax over the action axis (sublane reduction).
    # Exact divide so probabilities sum to 1 to f32 rounding.
    m = jnp.max(logits, axis=0, keepdims=True)
    e = jnp.exp(logits - m)
    denom = jnp.sum(e, axis=0, keepdims=True)
    out_t_ref[...] = (e / denom).astype(out_t_ref.dtype)


@functools.partial(jax.jit, static_argnames=("tile_b",))
def inverse_model_forward(state, next_state, params, tile_b=2048):
    """Whole forward pass in one Pallas kernel, gridded over the batch.

    Inputs are transposed once in XLA so the batch maps to the 128-lane axis
    inside the kernel (lane-dense matmul N, dense stores, sublane softmax).
    Weights / biases use constant index_maps so they are fetched into VMEM
    once and reused by every batch tile.
    """
    w1a, w1b = params["w1a"], params["w1b"]
    w2 = params["w2"]
    b1, b2 = params["b1"], params["b2"]

    B, L = state.shape
    H = w1a.shape[0]
    A = w2.shape[0]

    # Batch-on-lanes layout for the kernel.
    state_t = state.T                 # (L, B)
    next_state_t = next_state.T       # (L, B)

    # Static tile selection: whole batch in one block when small, otherwise
    # lane-aligned (multiple of 128) tiles with >= 2 grid steps so the
    # "parallel" axis can span both v7x TensorCores. Ragged tail blocks are
    # masked by Pallas (no whole-array padding / extra HBM pass).
    if B <= 128:
        tb = B
    else:
        tb = min(_round_up(tile_b, 128),
                 max(128, _round_up(_cdiv(B, 2), 128)))
    grid = (_cdiv(B, tb),)

    out_t = pl.pallas_call(
        _inverse_model_kernel,
        out_shape=jax.ShapeDtypeStruct((A, B), jnp.float32),
        grid=grid,
        in_specs=[
            pl.BlockSpec((L, tb), lambda i: (0, i)),   # state^T tile
            pl.BlockSpec((L, tb), lambda i: (0, i)),   # next_state^T tile
            pl.BlockSpec((H, L), lambda i: (0, 0)),    # W1[:, :L]  (resident)
            pl.BlockSpec((H, L), lambda i: (0, 0)),    # W1[:, L:]  (resident)
            pl.BlockSpec((A, H), lambda i: (0, 0)),    # W2         (resident)
            pl.BlockSpec((H, 1), lambda i: (0, 0)),    # b1 column
            pl.BlockSpec((A, 1), lambda i: (0, 0)),    # b2 column
        ],
        out_specs=pl.BlockSpec((A, tb), lambda i: (0, i)),
        compiler_params=pltpu.CompilerParams(
            dimension_semantics=("parallel",)),
    )(state_t, next_state_t, w1a, w1b, w2, b1, b2)

    return out_t.T                    # (B, A)


def init_params(key, latent_dim, action_dim, hidden_dim):
    """Parameters matching the PyTorch module, stored in (out, in) layout.

    linear_1.weight : (hidden, 2*latent), xavier_uniform -> split into
                      w1a = W1[:, :latent], w1b = W1[:, latent:]
    output.weight   : (action, hidden),   xavier_uniform
    biases          : nn.Linear default U(-1/sqrt(fan_in), 1/sqrt(fan_in)),
                      stored as (out, 1) columns for the batch-on-lanes kernel.
    """
    k1, k2, k3, k4 = jax.random.split(key, 4)
    in1, out1 = 2 * latent_dim, hidden_dim
    in2, out2 = hidden_dim, action_dim

    a1 = math.sqrt(6.0 / (in1 + out1))
    a2 = math.sqrt(6.0 / (in2 + out2))
    w1 = jax.random.uniform(k1, (out1, in1), jnp.float32, -a1, a1)
    w2 = jax.random.uniform(k2, (out2, in2), jnp.float32, -a2, a2)

    b1 = jax.random.uniform(k3, (out1,), jnp.float32,
                            -1.0 / math.sqrt(in1), 1.0 / math.sqrt(in1))
    b2 = jax.random.uniform(k4, (out2,), jnp.float32,
                            -1.0 / math.sqrt(in2), 1.0 / math.sqrt(in2))

    return {
        "w1a": w1[:, :latent_dim],
        "w1b": w1[:, latent_dim:],
        "w2": w2,
        "b1": b1.reshape(out1, 1),
        "b2": b2.reshape(out2, 1),
    }


def _reference_forward(state, next_state, params):
    x = jnp.concatenate([state, next_state], axis=-1)              # (B, 2L)
    w1 = jnp.concatenate([params["w1a"], params["w1b"]], axis=1)   # (H, 2L)
    h = jnp.dot(x, w1.T, precision=jax.lax.Precision.HIGHEST) + params["b1"][:, 0]
    h = jnp.where(h > 0, h, 0.01 * h)
    logits = (jnp.dot(h, params["w2"].T, precision=jax.lax.Precision.HIGHEST)
              + params["b2"][:, 0])
    return jax.nn.softmax(logits, axis=-1)


if __name__ == "__main__":
    latent_dim, action_dim, hidden_dim = 16, 6, 32

    key = jax.random.PRNGKey(0)
    kp, _, _ = jax.random.split(key, 3)
    params = init_params(kp, latent_dim, action_dim, hidden_dim)

    def check(batch, tile_b, seed):
        ks_, kn_ = jax.random.split(jax.random.PRNGKey(seed))
        s = jax.random.normal(ks_, (batch, latent_dim), jnp.float32)
        ns = jax.random.normal(kn_, (batch, latent_dim), jnp.float32)
        out = jax.block_until_ready(
            inverse_model_forward(s, ns, params, tile_b=tile_b))
        ref = _reference_forward(s, ns, params)
        assert out.shape == (batch, action_dim)
        assert jnp.allclose(out, ref, atol=1e-2, rtol=1e-2), \
            f"mismatch vs reference (B={batch})"
        assert jnp.allclose(jnp.sum(out, axis=-1), 1.0, atol=1e-3), \
            f"softmax rows must sum to 1 (B={batch})"

    check(4, 2048, 1)      # tiny batch -> single full-width block
    check(100, 2048, 2)    # B <= 128   -> single block equal to full dims
    check(300, 128, 3)     # 3 grid steps with a ragged (masked) tail block

    print("KERNEL_OK")
</pallas_src>

<mosaic_0001>
module attributes {stable_mosaic.version = 11 : i64} {
  func.func @_inverse_model_kernel(%arg0: i32, %arg1: memref<16x4xf32, #tpu.memory_space<vmem>>, %arg2: memref<16x4xf32, #tpu.memory_space<vmem>>, %arg3: memref<32x16xf32, #tpu.memory_space<vmem>>, %arg4: memref<32x16xf32, #tpu.memory_space<vmem>>, %arg5: memref<6x32xf32, #tpu.memory_space<vmem>>, %arg6: memref<32x1xf32, #tpu.memory_space<vmem>>, %arg7: memref<6x1xf32, #tpu.memory_space<vmem>>, %arg8: memref<6x4xf32, #tpu.memory_space<vmem>>) attributes {dimension_semantics = [#tpu.dimension_semantics<parallel>], iteration_bounds = array<i64: 1>, scalar_prefetch = 0 : i64, scratch_operands = 0 : i64, tpu.core_type = #tpu.core_type<tc>, window_params = [{transform_indices = @transform_0, window_bounds = array<i64: 16, 4>}, {transform_indices = @transform_1, window_bounds = array<i64: 16, 4>}, {pipeline_mode = #tpu.pipeline_mode<synchronous>, transform_indices = @transform_2, window_bounds = array<i64: 32, 16>}, {pipeline_mode = #tpu.pipeline_mode<synchronous>, transform_indices = @transform_3, window_bounds = array<i64: 32, 16>}, {pipeline_mode = #tpu.pipeline_mode<synchronous>, transform_indices = @transform_4, window_bounds = array<i64: 6, 32>}, {pipeline_mode = #tpu.pipeline_mode<synchronous>, transform_indices = @transform_5, window_bounds = array<i64: 32, 1>}, {pipeline_mode = #tpu.pipeline_mode<synchronous>, transform_indices = @transform_6, window_bounds = array<i64: 6, 1>}, {transform_indices = @transform_7, window_bounds = array<i64: 6, 4>}]} {
    %c0 = arith.constant 0 : index
    %c0_0 = arith.constant 0 : index
    %0 = vector.load %arg3[%c0, %c0_0] : memref<32x16xf32, #tpu.memory_space<vmem>>, vector<32x16xf32>
    %c0_1 = arith.constant 0 : index
    %c0_2 = arith.constant 0 : index
    %1 = vector.load %arg1[%c0_1, %c0_2] : memref<16x4xf32, #tpu.memory_space<vmem>>, vector<16x4xf32>
    %cst = arith.constant dense<0.000000e+00> : vector<32x4xf32>
    %2 = tpu.matmul %0, %1, %cst {dimension_numbers = #tpu.dot_dimension_numbers<[1], [0], [0], [1], [0, 0, 1, 1], [], []>} : vector<32x16xf32>, vector<16x4xf32>, vector<32x4xf32> -> vector<32x4xf32>
    %c0_3 = arith.constant 0 : index
    %c0_4 = arith.constant 0 : index
    %3 = vector.load %arg4[%c0_3, %c0_4] : memref<32x16xf32, #tpu.memory_space<vmem>>, vector<32x16xf32>
    %c0_5 = arith.constant 0 : index
    %c0_6 = arith.constant 0 : index
    %4 = vector.load %arg2[%c0_5, %c0_6] : memref<16x4xf32, #tpu.memory_space<vmem>>, vector<16x4xf32>
    %cst_7 = arith.constant dense<0.000000e+00> : vector<32x4xf32>
    %5 = tpu.matmul %3, %4, %cst_7 {dimension_numbers = #tpu.dot_dimension_numbers<[1], [0], [0], [1], [0, 0, 1, 1], [], []>} : vector<32x16xf32>, vector<16x4xf32>, vector<32x4xf32> -> vector<32x4xf32>
    %6 = arith.addf %2, %5 : vector<32x4xf32>
    %c0_8 = arith.constant 0 : index
    %c0_9 = arith.constant 0 : index
    %7 = vector.load %arg6[%c0_8, %c0_9] : memref<32x1xf32, #tpu.memory_space<vmem>>, vector<32x1xf32>
    %8 = vector.broadcast %7 : vector<32x1xf32> to vector<32x4xf32>
    %9 = arith.addf %6, %8 : vector<32x4xf32>
    %cst_10 = arith.constant 0.00999999977 : f32
    %10 = vector.broadcast %cst_10 : f32 to vector<32x4xf32>
    %11 = arith.mulf %10, %9 : vector<32x4xf32>
    %12 = arith.maximumf %9, %11 : vector<32x4xf32>
    %c0_11 = arith.constant 0 : index
    %c0_12 = arith.constant 0 : index
    %13 = vector.load %arg5[%c0_11, %c0_12] : memref<6x32xf32, #tpu.memory_space<vmem>>, vector<6x32xf32>
    %cst_13 = arith.constant dense<0.000000e+00> : vector<6x4xf32>
    %14 = tpu.matmul %13, %12, %cst_13 {dimension_numbers = #tpu.dot_dimension_numbers<[1], [0], [0], [1], [0, 0, 1, 1], [], []>} : vector<6x32xf32>, vector<32x4xf32>, vector<6x4xf32> -> vector<6x4xf32>
    %c0_14 = arith.constant 0 : index
    %c0_15 = arith.constant 0 : index
    %15 = vector.load %arg7[%c0_14, %c0_15] : memref<6x1xf32, #tpu.memory_space<vmem>>, vector<6x1xf32>
    %16 = vector.broadcast %15 : vector<6x1xf32> to vector<6x4xf32>
    %17 = arith.addf %14, %16 : vector<6x4xf32>
    %cst_16 = arith.constant dense<0xFF800000> : vector<4xf32>
    %18 = vector.multi_reduction <maximumf>, %17, %cst_16 [0] : vector<6x4xf32> to vector<4xf32>
    %19 = vector.shape_cast %18 : vector<4xf32> to vector<1x4xf32>
    %20 = vector.broadcast %19 : vector<1x4xf32> to vector<6x4xf32>
    %21 = arith.subf %17, %20 : vector<6x4xf32>
    %22 = math.exp %21 : vector<6x4xf32>
    %cst_17 = arith.constant dense<0.000000e+00> : vector<4xf32>
    %23 = vector.multi_reduction <add>, %22, %cst_17 [0] : vector<6x4xf32> to vector<4xf32>
    %24 = vector.shape_cast %23 : vector<4xf32> to vector<1x4xf32>
    %25 = vector.broadcast %24 : vector<1x4xf32> to vector<6x4xf32>
    %26 = arith.divf %22, %25 : vector<6x4xf32>
    %c0_18 = arith.constant 0 : index
    %c0_19 = arith.constant 0 : index
    %27 = vector.load %arg8[%c0_18, %c0_19] : memref<6x4xf32, #tpu.memory_space<vmem>>, vector<6x4xf32>
    tpu.vector_store %arg8[%c0_18, %c0_19], %26 {strides = array<i32>} : memref<6x4xf32, #tpu.memory_space<vmem>>, vector<6x4xf32>,
    return
  }
  func.func @transform_0(%arg0: i32) -> (i32, i32) {
    %c0_i32 = arith.constant 0 : i32
    %c0_i32_0 = arith.constant 0 : i32
    return %c0_i32, %arg0 : i32, i32
  }
  func.func @transform_1(%arg0: i32) -> (i32, i32) {
    %c0_i32 = arith.constant 0 : i32
    %c0_i32_0 = arith.constant 0 : i32
    return %c0_i32, %arg0 : i32, i32
  }
  func.func @transform_2(%arg0: i32) -> (i32, i32) {
    %c0_i32 = arith.constant 0 : i32
    %c0_i32_0 = arith.constant 0 : i32
    %c0_i32_1 = arith.constant 0 : i32
    return %c0_i32, %c0_i32_0 : i32, i32
  }
  func.func @transform_3(%arg0: i32) -> (i32, i32) {
    %c0_i32 = arith.constant 0 : i32
    %c0_i32_0 = arith.constant 0 : i32
    %c0_i32_1 = arith.constant 0 : i32
    return %c0_i32, %c0_i32_0 : i32, i32
  }
  func.func @transform_4(%arg0: i32) -> (i32, i32) {
    %c0_i32 = arith.constant 0 : i32
    %c0_i32_0 = arith.constant 0 : i32
    %c0_i32_1 = arith.constant 0 : i32
    return %c0_i32, %c0_i32_0 : i32, i32
  }
  func.func @transform_5(%arg0: i32) -> (i32, i32) {
    %c0_i32 = arith.constant 0 : i32
    %c0_i32_0 = arith.constant 0 : i32
    %c0_i32_1 = arith.constant 0 : i32
    return %c0_i32, %c0_i32_0 : i32, i32
  }
  func.func @transform_6(%arg0: i32) -> (i32, i32) {
    %c0_i32 = arith.constant 0 : i32
    %c0_i32_0 = arith.constant 0 : i32
    %c0_i32_1 = arith.constant 0 : i32
    return %c0_i32, %c0_i32_0 : i32, i32
  }
  func.func @transform_7(%arg0: i32) -> (i32, i32) {
    %c0_i32 = arith.constant 0 : i32
    %c0_i32_0 = arith.constant 0 : i32
    return %c0_i32, %arg0 : i32, i32
  }
}

</mosaic_0001>

<llo_original>
// kernel: inverse_model_forward.1
$region0: #{inverse_model_forward.1}
  #allocation0 [shape = 'u32[]', space=smem, size = 0x4, offset = 0x4, fixed_abs, tag = 'smem constant byte address 0x4 - core index']
  #allocation1 [shape = 'u32[144,128]{1,0:T(1,128)}', space=vmem, size = 0x12000, scoped, tag = 'internal scratch']
  %s0 = inlined_call_operand.vmem [shape: f32[16,4], index: 0, kind: input, shape index: {}]
  %s1 = inlined_call_operand.vmem [shape: f32[16,4], index: 1, kind: input, shape index: {}]
  %s2 = inlined_call_operand.vmem [shape: f32[32,16], index: 2, kind: input, shape index: {}]
  %s3 = inlined_call_operand.vmem [shape: f32[32,16], index: 3, kind: input, shape index: {}]
  %s4 = inlined_call_operand.vmem [shape: f32[6,32], index: 4, kind: input, shape index: {}]
  %s5 = inlined_call_operand.vmem [shape: f32[32,1], index: 5, kind: input, shape index: {}]
  %s6 = inlined_call_operand.vmem [shape: f32[6,1], index: 6, kind: input, shape index: {}]
  %s7 = inlined_call_operand.vmem [shape: f32[6,4], index: 7, kind: output, shape index: {}]
  %s8 = sld [smem:[#allocation0]]
  $region38: #{inverse_model_forward.1} parent=0
    _
  %s10 = ssub.s32 1, %s8
  %s11 = scalar_select 0, %s10, %s8
  // Predicated region
  $region2: #{inverse_model_forward.1} parent=0 // pred_check
    _
  $region3: #{inverse_model_forward.1} parent=0 // pred_check_branch
    %13 = sbr.rel (0) target = $region5
  $region4: #{inverse_model_forward.1} parent=0 // pred_region
    _
  $region5: #{inverse_model_forward.1} parent=0 // pred_fallthru
    _
  // Predicated region
  $region6: #{inverse_model_forward.1} parent=0 // pred_check
    _
  $region7: #{inverse_model_forward.1} parent=0 // pred_check_branch
    %15 = sbr.rel (0) target = $region9
  $region8: #{inverse_model_forward.1} parent=0 // pred_region
    _
  $region9: #{inverse_model_forward.1} parent=0 // pred_fallthru
    _
  // Predicated region
  $region10: #{inverse_model_forward.1} parent=0 // pred_check
    _
  $region11: #{inverse_model_forward.1} parent=0 // pred_check_branch
    %17 = sbr.rel (0) target = $region13
  $region12: #{inverse_model_forward.1} parent=0 // pred_region
    _
  $region13: #{inverse_model_forward.1} parent=0 // pred_fallthru
    _
  // Predicated region
  $region14: #{inverse_model_forward.1} parent=0 // pred_check
    _
  $region15: #{inverse_model_forward.1} parent=0 // pred_check_branch
    %19 = sbr.rel (0) target = $region17
  $region16: #{inverse_model_forward.1} parent=0 // pred_region
    _
  $region17: #{inverse_model_forward.1} parent=0 // pred_fallthru
    _
  // Predicated region
  $region18: #{inverse_model_forward.1} parent=0 // pred_check
    _
  $region19: #{inverse_model_forward.1} parent=0 // pred_check_branch
    %21 = sbr.rel (0) target = $region21
  $region20: #{inverse_model_forward.1} parent=0 // pred_region
    _
  $region21: #{inverse_model_forward.1} parent=0 // pred_fallthru
    _
  // Predicated region
  $region22: #{inverse_model_forward.1} parent=0 // pred_check
    _
  $region23: #{inverse_model_forward.1} parent=0 // pred_check_branch
    %23 = sbr.rel (0) target = $region25
  $region24: #{inverse_model_forward.1} parent=0 // pred_region
    _
  $region25: #{inverse_model_forward.1} parent=0 // pred_fallthru
    _
  // Predicated region
  $region26: #{inverse_model_forward.1} parent=0 // pred_check
    _
  $region27: #{inverse_model_forward.1} parent=0 // pred_check_branch
    %25 = sbr.rel (0) target = $region29
  $region28: #{inverse_model_forward.1} parent=0 // pred_region
    _
  $region29: #{inverse_model_forward.1} parent=0 // pred_fallthru
    _
  %v26 = vld [vmem:[%s2] sm:$0xff]
  %v27 = vld [vmem:[%s2 + $0x8] sm:$0xff]
  %v28 = vld [vmem:[%s2 + $0x10] sm:$0xff]
  %v29 = vld [vmem:[%s2 + $0x18] sm:$0xff]
  %v30 = vld [vmem:[%s0] sm:$0xff]
  %v31 = vld [vmem:[%s0 + $0x8] sm:$0xff]
  %v32 = vld [vmem:[%s3] sm:$0xff]
  %v33 = vld [vmem:[%s3 + $0x8] sm:$0xff]
  %v34 = vld [vmem:[%s3 + $0x10] sm:$0xff]
  %v35 = vld [vmem:[%s3 + $0x18] sm:$0xff]
  %v36 = vld [vmem:[%s1] sm:$0xff]
  %v37 = vld [vmem:[%s1 + $0x8] sm:$0xff]
  %vm38 = vcmask 130048
  %v40 = vsel %vm38, %v32, 0
  %v43 = vsel %vm38, %v33, 0
  %v46 = vsel %vm38, %v34, 0
  %v49 = vsel %vm38, %v35, 0
  %51 = vmatprep.subr.mxu0 0.0
  %52 = vmatpush1.msra.mxu0 %v36
  %53 = vmatprep.subr.mxu0 0.0
  %54 = vmatpush1.msra.mxu0 %v37
  %55 = vmatprep.subr.mxu0 0.0
  %56 = vmatpush1.msra.mxu0 0.0
  %57 = vmatprep.subr.mxu0 0.0
  %58 = vmatpush1.msra.mxu0 0.0
  %59 = vmatprep.subr.mxu0 0.0
  %60 = vmatpush1.msra.mxu0 0.0
  %61 = vmatprep.subr.mxu0 0.0
  %62 = vmatpush1.msra.mxu0 0.0
  %63 = vmatprep.subr.mxu0 0.0
  %64 = vmatpush1.msra.mxu0 0.0
  %65 = vmatprep.subr.mxu0 0.0
  %66 = vmatpush1.msra.mxu0 0.0
  %67 = vmatprep.subr.mxu0 0.0
  %68 = vmatpush1.msra.mxu0 0.0
  %69 = vmatprep.subr.mxu0 0.0
  %70 = vmatpush1.msra.mxu0 0.0
  %71 = vmatprep.subr.mxu0 0.0
  %72 = vmatpush1.msra.mxu0 0.0
  %73 = vmatprep.subr.mxu0 0.0
  %74 = vmatpush1.msra.mxu0 0.0
  %75 = vmatprep.subr.mxu0 0.0
  %76 = vmatpush1.msra.mxu0 0.0
  %77 = vmatprep.subr.mxu0 0.0
  %78 = vmatpush1.msra.mxu0 0.0
  %79 = vmatprep.subr.mxu0 0.0
  %80 = vmatpush1.msra.mxu0 0.0
  %81 = vmatprep.subr.mxu0 0.0
  %82 = vmatpush1.msra.mxu0 0.0
  %83 = vmatprep.subr.mxu0 0.0
  %84 = vmatpush1.msra.mxu0 0.0
  %85 = vmatprep.subr.mxu0 0.0
  %86 = vmatpush1.msra.mxu0 0.0
  %87 = vmatprep.subr.mxu0 0.0
  %88 = vmatpush1.msra.mxu0 0.0
  %89 = vmatprep.subr.mxu0 0.0
  %90 = vmatpush1.msra.mxu0 0.0
  %91 = vmatprep.subr.mxu0 0.0
  %92 = vmatpush1.msra.mxu0 0.0
  %93 = vmatprep.subr.mxu0 0.0
  %94 = vmatpush1.msra.mxu0 0.0
  %95 = vmatprep.subr.mxu0 0.0
  %96 = vmatpush1.msra.mxu0 0.0
  %97 = vmatprep.subr.mxu0 0.0
  %98 = vmatpush1.msra.mxu0 0.0
  %99 = vmatprep.subr.mxu0 0.0
  %100 = vmatpush1.msra.mxu0 0.0
  %101 = vmatprep.subr.mxu0 0.0
  %102 = vmatpush1.msra.mxu0 0.0
  %103 = vmatprep.subr.mxu0 0.0
  %104 = vmatpush1.msra.mxu0 0.0
  %105 = vmatprep.subr.mxu0 0.0
  %106 = vmatpush1.msra.mxu0 0.0
  %107 = vmatprep.subr.mxu0 0.0
  %108 = vmatpush1.msra.mxu0 0.0
  %109 = vmatprep.subr.mxu0 0.0
  %110 = vmatpush1.msra.mxu0 0.0
  %111 = vmatprep.subr.mxu0 0.0
  %112 = vmatpush1.msra.mxu0 0.0
  %113 = vmatprep.subr.mxu0 0.0
  %114 = vmatpush1.msra.mxu0 0.0
  %115 = vmatprep.mubr.f32.mxu0 0.0
  %116 = vmatmul.mubr.f32.gmra.mrb[0].mxu0 %v40
  %v117 = vpop.f32.mrb[0].mxu0
  %v118 = vadd.f32 0.0, %v117
  %v119 = vpop.f32.mrb[0].mxu0
  %120 = vmatprep.mubr.f32.mxu0 0.0
  %121 = vmatmul.mubr.f32.gmra.mrb[0].mxu0 %v43
  %v122 = vpop.f32.mrb[0].mxu0
  %v123 = vadd.f32 0.0, %v122
  %v124 = vpop.f32.mrb[0].mxu0
  %125 = vmatprep.mubr.f32.mxu0 0.0
  %126 = vmatmul.mubr.f32.gmra.mrb[0].mxu0 %v46
  %v127 = vpop.f32.mrb[0].mxu0
  %v128 = vadd.f32 0.0, %v127
  %v129 = vpop.f32.mrb[0].mxu0
  %130 = vmatprep.mubr.f32.mxu0 0.0
  %131 = vmatmul.mubr.f32.gmra.mrb[0].mxu0 %v49
  %v132 = vpop.f32.mrb[0].mxu0
  %v133 = vadd.f32 0.0, %v132
  %v134 = vpop.f32.mrb[0].mxu0
  %135 = vdwg.mxu0
  %v137 = vsel %vm38, %v26, 0
  %v140 = vsel %vm38, %v27, 0
  %v143 = vsel %vm38, %v28, 0
  %v146 = vsel %vm38, %v29, 0
  %148 = vmatprep.subr.mxu0 0.0
  %149 = vmatpush1.msra.mxu0 %v30
  %150 = vmatprep.subr.mxu0 0.0
  %151 = vmatpush1.msra.mxu0 %v31
  %152 = vmatprep.subr.mxu0 0.0
  %153 = vmatpush1.msra.mxu0 0.0
  %154 = vmatprep.subr.mxu0 0.0
  %155 = vmatpush1.msra.mxu0 0.0
  %156 = vmatprep.subr.mxu0 0.0
  %157 = vmatpush1.msra.mxu0 0.0
  %158 = vmatprep.subr.mxu0 0.0
  %159 = vmatpush1.msra.mxu0 0.0
  %160 = vmatprep.subr.mxu0 0.0
  %161 = vmatpush1.msra.mxu0 0.0
  %162 = vmatprep.subr.mxu0 0.0
  %163 = vmatpush1.msra.mxu0 0.0
  %164 = vmatprep.subr.mxu0 0.0
  %165 = vmatpush1.msra.mxu0 0.0
  %166 = vmatprep.subr.mxu0 0.0
  %167 = vmatpush1.msra.mxu0 0.0
  %168 = vmatprep.subr.mxu0 0.0
  %169 = vmatpush1.msra.mxu0 0.0
  %170 = vmatprep.subr.mxu0 0.0
  %171 = vmatpush1.msra.mxu0 0.0
  %172 = vmatprep.subr.mxu0 0.0
  %173 = vmatpush1.msra.mxu0 0.0
  %174 = vmatprep.subr.mxu0 0.0
  %175 = vmatpush1.msra.mxu0 0.0
  %176 = vmatprep.subr.mxu0 0.0
  %177 = vmatpush1.msra.mxu0 0.0
  %178 = vmatprep.subr.mxu0 0.0
  %179 = vmatpush1.msra.mxu0 0.0
  %180 = vmatprep.subr.mxu0 0.0
  %181 = vmatpush1.msra.mxu0 0.0
  %182 = vmatprep.subr.mxu0 0.0
  %183 = vmatpush1.msra.mxu0 0.0
  %184 = vmatprep.subr.mxu0 0.0
  %185 = vmatpush1.msra.mxu0 0.0
  %186 = vmatprep.subr.mxu0 0.0
  %187 = vmatpush1.msra.mxu0 0.0
  %188 = vmatprep.subr.mxu0 0.0
  %189 = vmatpush1.msra.mxu0 0.0
  %190 = vmatprep.subr.mxu0 0.0
  %191 = vmatpush1.msra.mxu0 0.0
  %192 = vmatprep.subr.mxu0 0.0
  %193 = vmatpush1.msra.mxu0 0.0
  %194 = vmatprep.subr.mxu0 0.0
  %195 = vmatpush1.msra.mxu0 0.0
  %196 = vmatprep.subr.mxu0 0.0
  %197 = vmatpush1.msra.mxu0 0.0
  %198 = vmatprep.subr.mxu0 0.0
  %199 = vmatpush1.msra.mxu0 0.0
  %200 = vmatprep.subr.mxu0 0.0
  %201 = vmatpush1.msra.mxu0 0.0
  %202 = vmatprep.subr.mxu0 0.0
  %203 = vmatpush1.msra.mxu0 0.0
  %204 = vmatprep.subr.mxu0 0.0
  %205 = vmatpush1.msra.mxu0 0.0
  %206 = vmatprep.subr.mxu0 0.0
  %207 = vmatpush1.msra.mxu0 0.0
  %208 = vmatprep.subr.mxu0 0.0
  %209 = vmatpush1.msra.mxu0 0.0
  %210 = vmatprep.subr.mxu0 0.0
  %211 = vmatpush1.msra.mxu0 0.0
  %212 = vmatprep.mubr.f32.mxu0 0.0
  %213 = vmatmul.mubr.f32.gmra.mrb[0].mxu0 %v137
  %v214 = vpop.f32.mrb[0].mxu0
  %v215 = vadd.f32 %v118, %v214
  %v216 = vpop.f32.mrb[0].mxu0
  %217 = vmatprep.mubr.f32.mxu0 0.0
  %218 = vmatmul.mubr.f32.gmra.mrb[0].mxu0 %v140
  %v219 = vpop.f32.mrb[0].mxu0
  %v220 = vadd.f32 %v123, %v219
  %v221 = vpop.f32.mrb[0].mxu0
  %222 = vmatprep.mubr.f32.mxu0 0.0
  %223 = vmatmul.mubr.f32.gmra.mrb[0].mxu0 %v143
  %v224 = vpop.f32.mrb[0].mxu0
  %v225 = vadd.f32 %v128, %v224
  %v226 = vpop.f32.mrb[0].mxu0
  %227 = vmatprep.mubr.f32.mxu0 0.0
  %228 = vmatmul.mubr.f32.gmra.mrb[0].mxu0 %v146
  %v229 = vpop.f32.mrb[0].mxu0
  %v230 = vadd.f32 %v133, %v229
  %v231 = vpop.f32.mrb[0].mxu0
  %232 = vdwg.mxu0
  %v233 = vld [vmem:[%s5] sm:$0xff]
  %v234 = vld [vmem:[%s5 + $0x8] sm:$0xff]
  %v235 = vld [vmem:[%s5 + $0x10] sm:$0xff]
  %v236 = vld [vmem:[%s5 + $0x18] sm:$0xff]
  %238 = vset.pattern.permute.xlu0 0
  %239 = vperm.xlu0 %238, %v233
  %v240 = vpop.permute.xlu0 %239
  %243 = vset.pattern.permute.xlu0 0
  %244 = vperm.xlu0 %243, %v234
  %v245 = vpop.permute.xlu0 %244
  %248 = vset.pattern.permute.xlu0 0
  %249 = vperm.xlu0 %248, %v235
  %v250 = vpop.permute.xlu0 %249
  %253 = vset.pattern.permute.xlu0 0
  %254 = vperm.xlu0 %253, %v236
  %v255 = vpop.permute.xlu0 %254
  %v257 = vadd.f32 %v215, %v240
  %v258 = vadd.f32 %v220, %v245
  %v259 = vadd.f32 %v225, %v250
  %v260 = vadd.f32 %v230, %v255
  %v261 = vmul.f32 %v257, 0.01
  %v262 = vmul.f32 %v258, 0.01
  %v263 = vmul.f32 %v259, 0.01
  %v264 = vmul.f32 %v260, 0.01
  %v265 = vmax.f32 %v257, %v261
  %v266 = vmax.f32 %v258, %v262
  %v267 = vmax.f32 %v259, %v263
  %v268 = vmax.f32 %v260, %v264
  %v269 = vld [vmem:[%s4] sm:$0x3f]
  %v270 = vld [vmem:[%s6] sm:$0x3f]
  %272 = vset.pattern.permute.xlu0 0
  %273 = vperm.xlu0 %272, %v270
  %v274 = vpop.permute.xlu0 %273
  %vm276 = vcmask 261120
  %v278 = vsel %vm276, %v269, 0
  %280 = vmatprep.subr.mxu0 0.0
  %281 = vmatpush1.msra.mxu0 %v265
  %282 = vmatprep.subr.mxu0 0.0
  %283 = vmatpush1.msra.mxu0 %v266
  %284 = vmatprep.subr.mxu0 0.0
  %285 = vmatpush1.msra.mxu0 %v267
  %286 = vmatprep.subr.mxu0 0.0
  %287 = vmatpush1.msra.mxu0 %v268
  %288 = vmatprep.subr.mxu0 0.0
  %289 = vmatpush1.msra.mxu0 0.0
  %290 = vmatprep.subr.mxu0 0.0
  %291 = vmatpush1.msra.mxu0 0.0
  %292 = vmatprep.subr.mxu0 0.0
  %293 = vmatpush1.msra.mxu0 0.0
  %294 = vmatprep.subr.mxu0 0.0
  %295 = vmatpush1.msra.mxu0 0.0
  %296 = vmatprep.subr.mxu0 0.0
  %297 = vmatpush1.msra.mxu0 0.0
  %298 = vmatprep.subr.mxu0 0.0
  %299 = vmatpush1.msra.mxu0 0.0
  %300 = vmatprep.subr.mxu0 0.0
  %301 = vmatpush1.msra.mxu0 0.0
  %302 = vmatprep.subr.mxu0 0.0
  %303 = vmatpush1.msra.mxu0 0.0
  %304 = vmatprep.subr.mxu0 0.0
  %305 = vmatpush1.msra.mxu0 0.0
  %306 = vmatprep.subr.mxu0 0.0
  %307 = vmatpush1.msra.mxu0 0.0
  %308 = vmatprep.subr.mxu0 0.0
  %309 = vmatpush1.msra.mxu0 0.0
  %310 = vmatprep.subr.mxu0 0.0
  %311 = vmatpush1.msra.mxu0 0.0
  %312 = vmatprep.subr.mxu0 0.0
  %313 = vmatpush1.msra.mxu0 0.0
  %314 = vmatprep.subr.mxu0 0.0
  %315 = vmatpush1.msra.mxu0 0.0
  %316 = vmatprep.subr.mxu0 0.0
  %317 = vmatpush1.msra.mxu0 0.0
  %318 = vmatprep.subr.mxu0 0.0
  %319 = vmatpush1.msra.mxu0 0.0
  %320 = vmatprep.subr.mxu0 0.0
  %321 = vmatpush1.msra.mxu0 0.0
  %322 = vmatprep.subr.mxu0 0.0
  %323 = vmatpush1.msra.mxu0 0.0
  %324 = vmatprep.subr.mxu0 0.0
  %325 = vmatpush1.msra.mxu0 0.0
  %326 = vmatprep.subr.mxu0 0.0
  %327 = vmatpush1.msra.mxu0 0.0
  %328 = vmatprep.subr.mxu0 0.0
  %329 = vmatpush1.msra.mxu0 0.0
  %330 = vmatprep.subr.mxu0 0.0
  %331 = vmatpush1.msra.mxu0 0.0
  %332 = vmatprep.subr.mxu0 0.0
  %333 = vmatpush1.msra.mxu0 0.0
  %334 = vmatprep.subr.mxu0 0.0
  %335 = vmatpush1.msra.mxu0 0.0
  %336 = vmatprep.subr.mxu0 0.0
  %337 = vmatpush1.msra.mxu0 0.0
  %338 = vmatprep.subr.mxu0 0.0
  %339 = vmatpush1.msra.mxu0 0.0
  %340 = vmatprep.subr.mxu0 0.0
  %341 = vmatpush1.msra.mxu0 0.0
  %342 = vmatprep.subr.mxu0 0.0
  %343 = vmatpush1.msra.mxu0 0.0
  %344 = vmatprep.mubr.f32.mxu0 0.0
  %345 = vmatmul.mubr.f32.gmra.mrb[0].mxu0 %v278
  %v346 = vpop.f32.mrb[0].mxu0
  %v347 = vadd.f32 %v274, %v346
  %v348 = vpop.f32.mrb[0].mxu0
  %349 = vdwg.mxu0
  %vm350 = vcmask 29696
  %v351 = vsel %vm350, %v347, -inf
  %v352 = vrot.slane %v351, 4
  %v353 = vmax.f32 %v351, %v352
  %v354 = vrot.slane %v353, 2
  %v355 = vmax.f32 %v353, %v354
  %v356 = vrot.slane %v355, 1
  %v357 = vmax.f32 %v355, %v356
  %v358 = vsub.f32 %v347, %v357
  %v359 = vmul.f32 %v358, 1.442695
  %v360 = vpow.pop %v359
  %v361 = vsel %vm350, %v360, 0.0
  %v362 = vrot.slane %v361, 4
  %v363 = vadd.f32 %v361, %v362
  %v364 = vrot.slane %v363, 2
  %v365 = vadd.f32 %v363, %v364
  %v366 = vrot.slane %v365, 1
  %v367 = vadd.f32 %v365, %v366
  %v368 = vrcp.pop %v367
  %v369 = vmul.f32 %v360, %v368
  %370 = vst.msk [vmem:[%s7] sm:$0x3f] %vm350, %v369
  // Predicated region
  $region30: #{inverse_model_forward.1} parent=0 // pred_check
    _
  $region31: #{inverse_model_forward.1} parent=0 // pred_check_branch
    %372 = sbr.rel (0) target = $region33
  $region32: #{inverse_model_forward.1} parent=0 // pred_region
    _
  $region33: #{inverse_model_forward.1} parent=0 // pred_fallthru
    _
  // Predicated region
  $region34: #{inverse_model_forward.1} parent=0 // pred_check
    _
  $region35: #{inverse_model_forward.1} parent=0 // pred_check_branch
    %374 = sbr.rel (0) target = $region37
  $region36: #{inverse_model_forward.1} parent=0 // pred_region
    _
  $region37: #{inverse_model_forward.1} parent=0 // pred_fallthru
    _

</llo_original>
